<compile_context>
chip_gen: v7x
topology: tpu7x:2x2x1
jax: 0.10.0
libtpu: 0.0.40
codegen_flags: <defaults>
</compile_context>

<pallas_src>
import functools

import jax
import jax.numpy as jnp
import numpy as np
from jax import lax
from jax.experimental import pallas as pl
from jax.experimental.pallas import tpu as pltpu


def _round_up(v: int, m: int) -> int:
    return (v + m - 1) // m * m


def _harmonic_kernel(xt_ref, out_ref, scr_ref, *, n_ch: int, n_h: int,
                     include_input: bool, freq_vals):
    """xt_ref: (C, TILE_N) lane-dense input block.
    out_ref:  (TILE_N, D) row-major output block (final layout).
    scr_ref:  (round_up(D, 8), TILE_N) f32 staging buffer for the lane-dense slab."""
    tn = xt_ref.shape[1]
    ch = n_ch * n_h
    out_dim = out_ref.shape[1]
    rows_pad = scr_ref.shape[0]

    # Frequencies baked in as compile-time scalars (no operand, no dense const).
    idx = lax.broadcasted_iota(jnp.int32, (n_h, 1), 0)
    fcol = jnp.full((n_h, 1), float(freq_vals[0]), jnp.float32)
    for h in range(1, n_h):
        fcol = jnp.where(idx == h, jnp.float32(freq_vals[h]), fcol)

    x = xt_ref[...]                               # (C, tn), N on the lane axis

    # Stage the embedding arguments: scr[c*H + h, :] = x[c, :] * freq[h]
    # (exact f32 elementwise multiplies, identical to the reference).
    for c in range(n_ch):                         # C is tiny & static
        scr_ref[c * n_h:(c + 1) * n_h, :] = x[c:c + 1, :] * fcol

    # ONE fused sin and ONE fused cos over the whole (C*H, tn) block.
    e = scr_ref[0:ch, :]
    scr_ref[0:ch, :] = jnp.sin(e)
    scr_ref[ch:2 * ch, :] = jnp.cos(e)

    row = 2 * ch
    if include_input:
        scr_ref[row:row + n_ch, :] = x            # exact pass-through of x
        row += n_ch
    if row < rows_pad:                            # keep pad rows deterministic
        scr_ref[row:rows_pad, :] = jnp.zeros((rows_pad - row, tn), jnp.float32)

    # Lane-dense -> row-major inside the kernel: the XLU is otherwise idle, and
    # the resulting (tn, D) HBM write-back is a single contiguous region, so no
    # XLA transpose pass over the (13x larger) output is needed afterwards.
    t = jnp.transpose(scr_ref[...])               # (tn, rows_pad)
    out_ref[...] = t[:, :out_dim]


def harmonic_embedding(
    x: jax.Array,
    *,
    n_harmonic_functions: int = 6,
    omega0: float = 1.0,
    logspace: bool = True,
    include_input: bool = True,
    tile_n: int = 8192,
) -> jax.Array:
    """HarmonicEmbedding forward.  x: (..., in_channels), float32."""
    in_channels = x.shape[-1]
    lead_shape = x.shape[:-1]
    n_h = n_harmonic_functions

    # Deterministic "buffer" init, matching the PyTorch __init__ (baked into
    # the kernel as compile-time scalars).
    if logspace:
        freq = 2.0 ** np.arange(n_h, dtype=np.float32)
    else:
        freq = np.linspace(1.0, 2.0 ** (n_h - 1), n_h, dtype=np.float32)
    freq_vals = tuple(float(v) for v in (omega0 * freq).astype(np.float32))

    ch = in_channels * n_h
    out_dim = 2 * ch + (in_channels if include_input else 0)

    n_rows = int(np.prod(lead_shape)) if lead_shape else 1
    x2d = x.reshape(n_rows, in_channels).astype(jnp.float32)
    # Small layout plumbing: put the point axis N on the 128-wide lane axis.
    # (Only ~12 B/row of extra traffic vs the 156 B/row output; the output
    # back-transpose — the expensive one — is now done inside the kernel.)
    xt = x2d.T                                     # (C, n_rows)

    # Big tiles amortise the per-grid-step overhead; cap so mid/large inputs
    # still keep >= 2 "parallel" blocks for the two v7x TensorCores.
    half_rows = -(-n_rows // 2)
    tn = max(128, min(_round_up(tile_n, 128), _round_up(half_rows, 128)))
    grid = (pl.cdiv(n_rows, tn),)                  # ragged final block handled by Pallas

    rows_pad = _round_up(out_dim, 8)
    kernel = functools.partial(_harmonic_kernel, n_ch=in_channels, n_h=n_h,
                               include_input=include_input, freq_vals=freq_vals)
    cost = pl.CostEstimate(
        flops=n_rows * ch,
        transcendentals=2 * n_rows * ch,
        bytes_accessed=4 * n_rows * (in_channels + out_dim),
    )

    out = pl.pallas_call(
        kernel,
        out_shape=jax.ShapeDtypeStruct((n_rows, out_dim), jnp.float32),
        grid_spec=pltpu.PrefetchScalarGridSpec(
            num_scalar_prefetch=0,
            grid=grid,
            in_specs=[pl.BlockSpec((in_channels, tn), lambda i: (0, i))],
            out_specs=pl.BlockSpec((tn, out_dim), lambda i: (i, 0)),
            scratch_shapes=[pltpu.VMEM((rows_pad, tn), jnp.float32)],
        ),
        compiler_params=pltpu.CompilerParams(
            dimension_semantics=("parallel",)),
        cost_estimate=cost,
    )(xt)

    return out.reshape(*lead_shape, out_dim)


def _reference(x, *, n_harmonic_functions=6, omega0=1.0, logspace=True,
               include_input=True):
    if logspace:
        frequencies = 2.0 ** jnp.arange(n_harmonic_functions,
                                        dtype=jnp.float32)
    else:
        frequencies = jnp.linspace(1.0, 2.0 ** (n_harmonic_functions - 1),
                                   n_harmonic_functions, dtype=jnp.float32)
    frequencies = omega0 * frequencies
    embed = (x[..., None] * frequencies).reshape(*x.shape[:-1], -1)
    if include_input:
        return jnp.concatenate((jnp.sin(embed), jnp.cos(embed), x), axis=-1)
    return jnp.concatenate((jnp.sin(embed), jnp.cos(embed)), axis=-1)


if __name__ == "__main__":
    # Small shapes consistent with typical usage: batch=2, points=16, xyz=3.
    x = jax.random.normal(jax.random.PRNGKey(0), (2, 16, 3), dtype=jnp.float32)
    out = jax.block_until_ready(
        harmonic_embedding(x, n_harmonic_functions=6, omega0=1.0,
                           logspace=True, include_input=True))
    ref = _reference(x)
    assert out.shape == (2, 16, 6 * 2 * 3 + 3), out.shape
    np.testing.assert_allclose(np.asarray(out), np.asarray(ref),
                               rtol=1e-6, atol=1e-6)

    # Multi-block grid + ragged last block + include_input=False path.
    x2 = jax.random.normal(jax.random.PRNGKey(1), (3, 100, 3),
                           dtype=jnp.float32)
    out2 = jax.block_until_ready(
        harmonic_embedding(x2, include_input=False, tile_n=256))
    ref2 = _reference(x2, include_input=False)
    assert out2.shape == (3, 100, 36), out2.shape
    np.testing.assert_allclose(np.asarray(out2), np.asarray(ref2),
                               rtol=1e-6, atol=1e-6)

    # Multi-block + ragged last block + include_input=True with default tiles.
    x3 = jax.random.uniform(jax.random.PRNGKey(2), (4, 600, 3),
                            dtype=jnp.float32, minval=-2.0, maxval=2.0)
    out3 = jax.block_until_ready(harmonic_embedding(x3))
    ref3 = _reference(x3)
    np.testing.assert_allclose(np.asarray(out3), np.asarray(ref3),
                               rtol=1e-6, atol=1e-6)

    print("KERNEL_OK")
</pallas_src>

<mosaic_0001>
module attributes {stable_mosaic.version = 11 : i64} {
  func.func @_harmonic_kernel(%arg0: i32, %arg1: memref<3x128xf32, #tpu.memory_space<vmem>>, %arg2: memref<128x39xf32, #tpu.memory_space<vmem>>, %arg3: memref<40x128xf32, #tpu.memory_space<vmem>>) attributes {dimension_semantics = [#tpu.dimension_semantics<parallel>], iteration_bounds = array<i64: 1>, scalar_prefetch = 0 : i64, scratch_operands = 1 : i64, tpu.core_type = #tpu.core_type<tc>, window_params = [{transform_indices = @transform_0, window_bounds = array<i64: 3, 128>}, {transform_indices = @transform_1, window_bounds = array<i64: 128, 39>}]} {
    %0 = tpu.iota {dimensions = array<i32: 0>} : vector<6x1xi32>
    %cst = arith.constant 1.000000e+00 : f32
    %1 = vector.broadcast %cst : f32 to vector<6x1xf32>
    %c1_i32 = arith.constant 1 : i32
    %2 = vector.broadcast %c1_i32 : i32 to vector<6x1xi32>
    %3 = arith.cmpi eq, %0, %2 : vector<6x1xi32>
    %cst_0 = arith.constant 2.000000e+00 : f32
    %4 = vector.broadcast %cst_0 : f32 to vector<6x1xf32>
    %5 = arith.select %3, %4, %1 : vector<6x1xi1>, vector<6x1xf32>
    %c2_i32 = arith.constant 2 : i32
    %6 = vector.broadcast %c2_i32 : i32 to vector<6x1xi32>
    %7 = arith.cmpi eq, %0, %6 : vector<6x1xi32>
    %cst_1 = arith.constant 4.000000e+00 : f32
    %8 = vector.broadcast %cst_1 : f32 to vector<6x1xf32>
    %9 = arith.select %7, %8, %5 : vector<6x1xi1>, vector<6x1xf32>
    %c3_i32 = arith.constant 3 : i32
    %10 = vector.broadcast %c3_i32 : i32 to vector<6x1xi32>
    %11 = arith.cmpi eq, %0, %10 : vector<6x1xi32>
    %cst_2 = arith.constant 8.000000e+00 : f32
    %12 = vector.broadcast %cst_2 : f32 to vector<6x1xf32>
    %13 = arith.select %11, %12, %9 : vector<6x1xi1>, vector<6x1xf32>
    %c4_i32 = arith.constant 4 : i32
    %14 = vector.broadcast %c4_i32 : i32 to vector<6x1xi32>
    %15 = arith.cmpi eq, %0, %14 : vector<6x1xi32>
    %cst_3 = arith.constant 1.600000e+01 : f32
    %16 = vector.broadcast %cst_3 : f32 to vector<6x1xf32>
    %17 = arith.select %15, %16, %13 : vector<6x1xi1>, vector<6x1xf32>
    %c5_i32 = arith.constant 5 : i32
    %18 = vector.broadcast %c5_i32 : i32 to vector<6x1xi32>
    %19 = arith.cmpi eq, %0, %18 : vector<6x1xi32>
    %cst_4 = arith.constant 3.200000e+01 : f32
    %20 = vector.broadcast %cst_4 : f32 to vector<6x1xf32>
    %21 = arith.select %19, %20, %17 : vector<6x1xi1>, vector<6x1xf32>
    %c0 = arith.constant 0 : index
    %c0_5 = arith.constant 0 : index
    %22 = vector.load %arg1[%c0, %c0_5] : memref<3x128xf32, #tpu.memory_space<vmem>>, vector<3x128xf32>
    %23 = vector.extract_strided_slice %22 {offsets = [0, 0], sizes = [1, 128], strides = [1, 1]} : vector<3x128xf32> to vector<1x128xf32>
    %24 = vector.broadcast %23 : vector<1x128xf32> to vector<6x128xf32>
    %25 = vector.broadcast %21 : vector<6x1xf32> to vector<6x128xf32>
    %26 = arith.mulf %24, %25 : vector<6x128xf32>
    %c0_6 = arith.constant 0 : index
    %c0_7 = arith.constant 0 : index
    %27 = vector.load %arg3[%c0_6, %c0_7] : memref<40x128xf32, #tpu.memory_space<vmem>>, vector<6x128xf32>
    tpu.vector_store %arg3[%c0_6, %c0_7], %26 {strides = array<i32>} : memref<40x128xf32, #tpu.memory_space<vmem>>, vector<6x128xf32>,
    %28 = vector.extract_strided_slice %22 {offsets = [1, 0], sizes = [1, 128], strides = [1, 1]} : vector<3x128xf32> to vector<1x128xf32>
    %29 = vector.broadcast %28 : vector<1x128xf32> to vector<6x128xf32>
    %30 = vector.broadcast %21 : vector<6x1xf32> to vector<6x128xf32>
    %31 = arith.mulf %29, %30 : vector<6x128xf32>
    %c6 = arith.constant 6 : index
    %c0_8 = arith.constant 0 : index
    %32 = vector.load %arg3[%c6, %c0_8] : memref<40x128xf32, #tpu.memory_space<vmem>>, vector<6x128xf32>
    tpu.vector_store %arg3[%c6, %c0_8], %31 {strides = array<i32>} : memref<40x128xf32, #tpu.memory_space<vmem>>, vector<6x128xf32>,
    %33 = vector.extract_strided_slice %22 {offsets = [2, 0], sizes = [1, 128], strides = [1, 1]} : vector<3x128xf32> to vector<1x128xf32>
    %34 = vector.broadcast %33 : vector<1x128xf32> to vector<6x128xf32>
    %35 = vector.broadcast %21 : vector<6x1xf32> to vector<6x128xf32>
    %36 = arith.mulf %34, %35 : vector<6x128xf32>
    %c12 = arith.constant 12 : index
    %c0_9 = arith.constant 0 : index
    %37 = vector.load %arg3[%c12, %c0_9] : memref<40x128xf32, #tpu.memory_space<vmem>>, vector<6x128xf32>
    tpu.vector_store %arg3[%c12, %c0_9], %36 {strides = array<i32>} : memref<40x128xf32, #tpu.memory_space<vmem>>, vector<6x128xf32>,
    %c0_10 = arith.constant 0 : index
    %c0_11 = arith.constant 0 : index
    %38 = vector.load %arg3[%c0_10, %c0_11] : memref<40x128xf32, #tpu.memory_space<vmem>>, vector<18x128xf32>
    %39 = math.sin %38 : vector<18x128xf32>
    %c0_12 = arith.constant 0 : index
    %c0_13 = arith.constant 0 : index
    %40 = vector.load %arg3[%c0_12, %c0_13] : memref<40x128xf32, #tpu.memory_space<vmem>>, vector<18x128xf32>
    tpu.vector_store %arg3[%c0_12, %c0_13], %39 {strides = array<i32>} : memref<40x128xf32, #tpu.memory_space<vmem>>, vector<18x128xf32>,
    %41 = math.cos %38 : vector<18x128xf32>
    %c18 = arith.constant 18 : index
    %c0_14 = arith.constant 0 : index
    %42 = vector.load %arg3[%c18, %c0_14] : memref<40x128xf32, #tpu.memory_space<vmem>>, vector<18x128xf32>
    tpu.vector_store %arg3[%c18, %c0_14], %41 {strides = array<i32>} : memref<40x128xf32, #tpu.memory_space<vmem>>, vector<18x128xf32>,
    %c36 = arith.constant 36 : index
    %c0_15 = arith.constant 0 : index
    %43 = vector.load %arg3[%c36, %c0_15] : memref<40x128xf32, #tpu.memory_space<vmem>>, vector<3x128xf32>
    tpu.vector_store %arg3[%c36, %c0_15], %22 {strides = array<i32>} : memref<40x128xf32, #tpu.memory_space<vmem>>, vector<3x128xf32>,
    %cst_16 = arith.constant 0.000000e+00 : f32
    %44 = vector.broadcast %cst_16 : f32 to vector<1x128xf32>
    %c39 = arith.constant 39 : index
    %c0_17 = arith.constant 0 : index
    %45 = vector.load %arg3[%c39, %c0_17] : memref<40x128xf32, #tpu.memory_space<vmem>>, vector<1x128xf32>
    tpu.vector_store %arg3[%c39, %c0_17], %44 {strides = array<i32>} : memref<40x128xf32, #tpu.memory_space<vmem>>, vector<1x128xf32>,
    %c0_18 = arith.constant 0 : index
    %c0_19 = arith.constant 0 : index
    %46 = vector.load %arg3[%c0_18, %c0_19] : memref<40x128xf32, #tpu.memory_space<vmem>>, vector<40x128xf32>
    %47 = tpu.transpose %46, [1, 0] : vector<40x128xf32> -> vector<128x40xf32>
    %48 = vector.extract_strided_slice %47 {offsets = [0, 0], sizes = [128, 39], strides = [1, 1]} : vector<128x40xf32> to vector<128x39xf32>
    %c0_20 = arith.constant 0 : index
    %c0_21 = arith.constant 0 : index
    %49 = vector.load %arg2[%c0_20, %c0_21] : memref<128x39xf32, #tpu.memory_space<vmem>>, vector<128x39xf32>
    tpu.vector_store %arg2[%c0_20, %c0_21], %48 {strides = array<i32>} : memref<128x39xf32, #tpu.memory_space<vmem>>, vector<128x39xf32>,
    return
  }
  func.func @transform_0(%arg0: i32) -> (i32, i32) {
    %c0_i32 = arith.constant 0 : i32
    %c0_i32_0 = arith.constant 0 : i32
    return %c0_i32, %arg0 : i32, i32
  }
  func.func @transform_1(%arg0: i32) -> (i32, i32) {
    %c0_i32 = arith.constant 0 : i32
    %c0_i32_0 = arith.constant 0 : i32
    return %arg0, %c0_i32 : i32, i32
  }
}

</mosaic_0001>

<llo_original>
// kernel: tpu_custom_call.1
$region0: #{tpu_custom_call.1}
  #allocation0 [shape = 'u32[]', space=smem, size = 0x4, offset = 0x4, fixed_abs, tag = 'smem constant byte address 0x4 - core index']
  #allocation1 [shape = 'u32[144,128]{1,0:T(1,128)}', space=vmem, size = 0x12000, scoped, tag = 'internal scratch']
  #allocation2 [shape = 'f32[40,128]{1,0:T(8,128)}', space=vmem, size = 0x5000, scoped, tag = 'scratch operand']
  %s0 = inlined_call_operand.hbm [shape: f32[3,32], index: 0, kind: input, shape index: {}]
  %s1 = inlined_call_operand.hbm [shape: f32[32,39], index: 1, kind: output, shape index: {}]
  %s2 = sld [smem:[#allocation0]]
  $region18: #{tpu_custom_call.1} parent=0
    _
  %s4 = ssub.s32 1, %s2
  %s5 = scalar_select 0, %s4, %s2
  $region1: #{tpu_custom_call.1} parent=0
    #allocation3 [shape = 'u8[2048]{0}', space=vmem, size = 0x800, scoped, tag = 'input window, operand 0, single buffered']
    #allocation4 [shape = 's32[1]{0}', space=sflag, size = 0x4, scoped, tag = 'scoped memory for tpu_custom_call.1']
    #allocation5 [shape = 's32[1]{0}', space=sflag, size = 0x4, scoped, tag = 'scoped memory for tpu_custom_call.1']
    #allocation6 [shape = 'u8[65536]{0}', space=vmem, size = 0x10000, scoped, tag = 'output window, operand 0, single buffered']
    %6 = vsyncpa [#allocation4], 0
    %7 = vsyncpa [#allocation5], 0
    // Predicated region
    $region2: #{tpu_custom_call.1} parent=1 // pred_check
      _
    $region3: #{tpu_custom_call.1} parent=1 // pred_check_branch
      %9 = sbr.rel (0) target = $region5
    $region4: #{tpu_custom_call.1} parent=1 // pred_region
      %s11 = ssub.s32 64, 64
      %12 = vsyncadd [#allocation4], %s11
      %s14 = sshll.u32 [#allocation3], 4
      %s15 = int_to_ptr.vmem [resolvable:$true] %s14
      %17 = dma.hbm_to_vmem [thread:$0]  %s0, 64, %s15, [#allocation4]
    $region5: #{tpu_custom_call.1} parent=1 // pred_fallthru
      _
    // Predicated region
    $region6: #{tpu_custom_call.1} parent=1 // pred_check
      _
    $region7: #{tpu_custom_call.1} parent=1 // pred_check_branch
      %19 = sbr.rel (0) target = $region9
    $region8: #{tpu_custom_call.1} parent=1 // pred_region
      %20 = dma.done [#allocation4], 64
    $region9: #{tpu_custom_call.1} parent=1 // pred_fallthru
      _
    %v21 = vlaneseq
    %v22 = vshrl.u32 %v21, 7
    %vm23 = vcmp.eq.s32.totalorder %v22, 1
    %v24 = vsel %vm23, 2.0, 1.0
    %vm25 = vcmp.eq.s32.totalorder %v22, 2
    %v26 = vsel %vm25, 4.0, %v24
    %vm27 = vcmp.eq.s32.totalorder %v22, 3
    %v28 = vsel %vm27, 8.0, %v26
    %vm29 = vcmp.eq.s32.totalorder %v22, 4
    %v30 = vsel %vm29, 16.0, %v28
    %vm31 = vcmp.eq.s32.totalorder %v22, 5
    %v32 = vsel %vm31, 32.0, %v30
    %v33 = vld [vmem:[#allocation3] sm:$0x7]
    %v34 = vlaneseq
    %v35 = vshrl.u32 %v34, 7
    %v36 = vsub.s32 0, %v35
    %v37 = vrot.slane %v33, %v36
    %v38 = vmul.f32 %v37, %v32
    %39 = vst [vmem:[#allocation2] sm:$0x3f] %v38
    %v40 = vlaneseq
    %v41 = vshrl.u32 %v40, 7
    %v42 = vsub.s32 1, %v41
    %v43 = vrot.slane %v33, %v42
    %v44 = vmul.f32 %v43, %v32
    %45 = vst [vmem:[#allocation2 + $0x6] sm:$0x3f] %v44
    %v46 = vlaneseq
    %v47 = vshrl.u32 %v46, 7
    %v48 = vsub.s32 2, %v47
    %v49 = vrot.slane %v33, %v48
    %v50 = vmul.f32 %v49, %v32
    %51 = vst [vmem:[#allocation2 + $0xc] sm:$0x3f] %v50
    %v52 = vld [vmem:[#allocation2] sm:$0xff]
    %v53 = vld [vmem:[#allocation2 + $0x8] sm:$0xff]
    %v54 = vld [vmem:[#allocation2 + $0x10] sm:$0x3]
    %v55 = vand.u32 2147483647, %v52
    %vm56 = vcmp.le.f32.partialorder %v55, 0.7853982
    %vm57 = vcmp.lt.s32.totalorder %v52, 0
    %v58 = vand.u32 %v52, 2139095040
    %v59 = vshrl.u32 %v58, 23
    %v60 = vsub.s32 %v59, 127
    %v61 = vand.u32 2147483647, %v52
    %v62 = vand.u32 %v61, 8388607
    %v63 = vor.u32 %v62, 8388608
    %v64 = vsub.s32 0, %v63
    %v65 = vadd.s32 %v60, 1
    %vm66 = vcmp.gt.s32.totalorder %v65, 0
    %v67 = vsel %vm66, %v65, 0
    %v68 = vshrl.u32 %v67, 5
    %v69 = vand.u32 %v67, 31
    %v70 = vsub.s32 32, %v69
    %v71 = vshrl.u32 683565275, %v70
    %v72 = vshll.u32 683565275, %v69
    %v73 = vshrl.u32 2475754826, %v70
    %v74 = vor.u32 %v72, %v73
    %v75 = vshll.u32 2475754826, %v69
    %v76 = vshrl.u32 2131351028, %v70
    %v77 = vor.u32 %v75, %v76
    %v78 = vshll.u32 2131351028, %v69
    %v79 = vshrl.u32 2102212464, %v70
    %v80 = vor.u32 %v78, %v79
    %v81 = vshll.u32 2102212464, %v69
    %v82 = vshrl.u32 920167782, %v70
    %v83 = vor.u32 %v81, %v82
    %v84 = vshll.u32 920167782, %v69
    %v85 = vshrl.u32 1326507024, %v70
    %v86 = vor.u32 %v84, %v85
    %vm87 = vcmp.lt.s32.totalorder %v68, 1
    %vm88 = vcmp.lt.s32.totalorder %v68, 2
    %vm89 = vcmp.lt.s32.totalorder %v68, 3
    %vm90 = vcmp.lt.s32.totalorder %v68, 4
    %v91 = vsel %vm87, %v71, %v74
    %v92 = vsel %vm90, %v80, 2102212464
    %v93 = vsel %vm89, %v77, %v92
    %v94 = vsel %vm88, %v91, %v93
    %v95 = vsel %vm87, %v74, %v77
    %v96 = vsel %vm90, %v83, 920167782
    %v97 = vsel %vm89, %v80, %v96
    %v98 = vsel %vm88, %v95, %v97
    %v99 = vsel %vm87, %v77, %v80
    %v100 = vsel %vm90, %v86, 1326507024
    %v101 = vsel %vm89, %v83, %v100
    %v102 = vsel %vm88, %v99, %v101
    %v103 = vshll.u32 %v63, 8
    %v104 = vmul.u32.u64.compose %v103, %v102
    %v105 = vextract.low.u32 %v104
    %v106 = vextract.high.u32 %v104
    %v107 = vmul.u32.u64.compose %v103, %v98
    %v108 = vextract.low.u32 %v107
    %v109 = vextract.high.u32 %v107
    %v110 = vmul.u32 %v103, %v94
    %v111 = vadd.s32 %v106, %v108
    %vm112 = vc.u32 %v106, %v108
    %v113 = vadd.s32 %v109, 1
    %v114 = vsel %vm112, %v113, %v109
    %v115 = vadd.s32 %v110, %v114
    %v116 = vadd.s32 %v115, 536870912
    %v117 = vshrl.u32 %v116, 30
    %v118 = vshll.u32 %v117, 30
    %v119 = vsub.s32 %v115, %v118
    %vm120 = vcmp.lt.s32.totalorder %v119, 0
    %v121 = vsub.s32 0, %v119
    %v122 = vsel %vm120, %v121, %v119
    %v123 = vclz %v122
    %v124 = vsub.s32 %v123, 2
    %vm125 = vcmp.gt.s32.totalorder 0, %v124
    %v126 = vsel %vm125, 0, %v124
    %v127 = vsub.s32 32, %v126
    %v128 = vshll.u32 %v119, %v126
    %v129 = vshrl.u32 %v111, %v127
    %v130 = vor.u32 %v128, %v129
    %v131 = vsub.s32 4294967266, %v126
    %v132 = vadd.s32 %v131, 127
    %v133 = vshll.u32 %v132, 23
    %v134 = vor.u32 4788187, %v133
    %v135 = vand.u32 2147483647, %v134
    %v137 = vcvt.s32.f32 %v130
    %v138 = vmul.f32 %v137, %v135
    %v139 = vxor.u32 %v138, 2147483648
    %v140 = vsel %vm57, %v139, %v138
    %v141 = vsub.s32 4, %v117
    %v142 = vsel %vm57, %v141, %v117
    %v143 = vsel %vm56, %v52, %v140
    %v144 = vsel %vm56, 0, %v142
    %v145 = vcosq.f32.pop %v143
    %v146 = vsinq.f32.pop %v143
    %vm147 = vweird.f32 %v52
    %v148 = vadd.s32 %v144, 3
    %v149 = vand.u32 %v148, 3
    %vm150 = vcmp.lt.s32.totalorder %v149, 2
    %vm151 = vcmp.eq.s32.totalorder %v149, 0
    %v152 = vxor.u32 %v146, 2147483648
    %v153 = vsel %vm151, %v145, %v152
    %vm154 = vcmp.eq.s32.totalorder %v149, 2
    %v155 = vxor.u32 %v145, 2147483648
    %v156 = vsel %vm154, %v155, %v146
    %v157 = vsel %vm150, %v153, %v156
    %v158 = vsel %vm147, nan, %v157
    %v159 = vand.u32 2147483647, %v53
    %vm160 = vcmp.le.f32.partialorder %v159, 0.7853982
    %vm161 = vcmp.lt.s32.totalorder %v53, 0
    %v162 = vand.u32 %v53, 2139095040
    %v163 = vshrl.u32 %v162, 23
    %v164 = vsub.s32 %v163, 127
    %v165 = vand.u32 2147483647, %v53
    %v166 = vand.u32 %v165, 8388607
    %v167 = vor.u32 %v166, 8388608
    %v168 = vsub.s32 0, %v167
    %v169 = vadd.s32 %v164, 1
    %vm170 = vcmp.gt.s32.totalorder %v169, 0
    %v171 = vsel %vm170, %v169, 0
    %v172 = vshrl.u32 %v171, 5
    %v173 = vand.u32 %v171, 31
    %v174 = vsub.s32 32, %v173
    %v175 = vshrl.u32 683565275, %v174
    %v176 = vshll.u32 683565275, %v173
    %v177 = vshrl.u32 2475754826, %v174
    %v178 = vor.u32 %v176, %v177
    %v179 = vshll.u32 2475754826, %v173
    %v180 = vshrl.u32 2131351028, %v174
    %v181 = vor.u32 %v179, %v180
    %v182 = vshll.u32 2131351028, %v173
    %v183 = vshrl.u32 2102212464, %v174
    %v184 = vor.u32 %v182, %v183
    %v185 = vshll.u32 2102212464, %v173
    %v186 = vshrl.u32 920167782, %v174
    %v187 = vor.u32 %v185, %v186
    %v188 = vshll.u32 920167782, %v173
    %v189 = vshrl.u32 1326507024, %v174
    %v190 = vor.u32 %v188, %v189
    %vm191 = vcmp.lt.s32.totalorder %v172, 1
    %vm192 = vcmp.lt.s32.totalorder %v172, 2
    %vm193 = vcmp.lt.s32.totalorder %v172, 3
    %vm194 = vcmp.lt.s32.totalorder %v172, 4
    %v195 = vsel %vm191, %v175, %v178
    %v196 = vsel %vm194, %v184, 2102212464
    %v197 = vsel %vm193, %v181, %v196
    %v198 = vsel %vm192, %v195, %v197
    %v199 = vsel %vm191, %v178, %v181
    %v200 = vsel %vm194, %v187, 920167782
    %v201 = vsel %vm193, %v184, %v200
    %v202 = vsel %vm192, %v199, %v201
    %v203 = vsel %vm191, %v181, %v184
    %v204 = vsel %vm194, %v190, 1326507024
    %v205 = vsel %vm193, %v187, %v204
    %v206 = vsel %vm192, %v203, %v205
    %v207 = vshll.u32 %v167, 8
    %v208 = vmul.u32.u64.compose %v207, %v206
    %v209 = vextract.low.u32 %v208
    %v210 = vextract.high.u32 %v208
    %v211 = vmul.u32.u64.compose %v207, %v202
    %v212 = vextract.low.u32 %v211
    %v213 = vextract.high.u32 %v211
    %v214 = vmul.u32 %v207, %v198
    %v215 = vadd.s32 %v210, %v212
    %vm216 = vc.u32 %v210, %v212
    %v217 = vadd.s32 %v213, 1
    %v218 = vsel %vm216, %v217, %v213
    %v219 = vadd.s32 %v214, %v218
    %v220 = vadd.s32 %v219, 536870912
    %v221 = vshrl.u32 %v220, 30
    %v222 = vshll.u32 %v221, 30
    %v223 = vsub.s32 %v219, %v222
    %vm224 = vcmp.lt.s32.totalorder %v223, 0
    %v225 = vsub.s32 0, %v223
    %v226 = vsel %vm224, %v225, %v223
    %v227 = vclz %v226
    %v228 = vsub.s32 %v227, 2
    %vm229 = vcmp.gt.s32.totalorder 0, %v228
    %v230 = vsel %vm229, 0, %v228
    %v231 = vsub.s32 32, %v230
    %v232 = vshll.u32 %v223, %v230
    %v233 = vshrl.u32 %v215, %v231
    %v234 = vor.u32 %v232, %v233
    %v235 = vsub.s32 4294967266, %v230
    %v236 = vadd.s32 %v235, 127
    %v237 = vshll.u32 %v236, 23
    %v238 = vor.u32 4788187, %v237
    %v239 = vand.u32 2147483647, %v238
    %v241 = vcvt.s32.f32 %v234
    %v242 = vmul.f32 %v241, %v239
    %v243 = vxor.u32 %v242, 2147483648
    %v244 = vsel %vm161, %v243, %v242
    %v245 = vsub.s32 4, %v221
    %v246 = vsel %vm161, %v245, %v221
    %v247 = vsel %vm160, %v53, %v244
    %v248 = vsel %vm160, 0, %v246
    %v249 = vcosq.f32.pop %v247
    %v250 = vsinq.f32.pop %v247
    %vm251 = vweird.f32 %v53
    %v252 = vadd.s32 %v248, 3
    %v253 = vand.u32 %v252, 3
    %vm254 = vcmp.lt.s32.totalorder %v253, 2
    %vm255 = vcmp.eq.s32.totalorder %v253, 0
    %v256 = vxor.u32 %v250, 2147483648
    %v257 = vsel %vm255, %v249, %v256
    %vm258 = vcmp.eq.s32.totalorder %v253, 2
    %v259 = vxor.u32 %v249, 2147483648
    %v260 = vsel %vm258, %v259, %v250
    %v261 = vsel %vm254, %v257, %v260
    %v262 = vsel %vm251, nan, %v261
    %v263 = vand.u32 2147483647, %v54
    %vm264 = vcmp.le.f32.partialorder %v263, 0.7853982
    %vm265 = vcmp.lt.s32.totalorder %v54, 0
    %v266 = vand.u32 %v54, 2139095040
    %v267 = vshrl.u32 %v266, 23
    %v268 = vsub.s32 %v267, 127
    %v269 = vand.u32 2147483647, %v54
    %v270 = vand.u32 %v269, 8388607
    %v271 = vor.u32 %v270, 8388608
    %v272 = vsub.s32 0, %v271
    %v273 = vadd.s32 %v268, 1
    %vm274 = vcmp.gt.s32.totalorder %v273, 0
    %v275 = vsel %vm274, %v273, 0
    %v276 = vshrl.u32 %v275, 5
    %v277 = vand.u32 %v275, 31
    %v278 = vsub.s32 32, %v277
    %v279 = vshrl.u32 683565275, %v278
    %v280 = vshll.u32 683565275, %v277
    %v281 = vshrl.u32 2475754826, %v278
    %v282 = vor.u32 %v280, %v281
    %v283 = vshll.u32 2475754826, %v277
    %v284 = vshrl.u32 2131351028, %v278
    %v285 = vor.u32 %v283, %v284
    %v286 = vshll.u32 2131351028, %v277
    %v287 = vshrl.u32 2102212464, %v278
    %v288 = vor.u32 %v286, %v287
    %v289 = vshll.u32 2102212464, %v277
    %v290 = vshrl.u32 920167782, %v278
    %v291 = vor.u32 %v289, %v290
    %v292 = vshll.u32 920167782, %v277
    %v293 = vshrl.u32 1326507024, %v278
    %v294 = vor.u32 %v292, %v293
    %vm295 = vcmp.lt.s32.totalorder %v276, 1
    %vm296 = vcmp.lt.s32.totalorder %v276, 2
    %vm297 = vcmp.lt.s32.totalorder %v276, 3
    %vm298 = vcmp.lt.s32.totalorder %v276, 4
    %v299 = vsel %vm295, %v279, %v282
    %v300 = vsel %vm298, %v288, 2102212464
    %v301 = vsel %vm297, %v285, %v300
    %v302 = vsel %vm296, %v299, %v301
    %v303 = vsel %vm295, %v282, %v285
    %v304 = vsel %vm298, %v291, 920167782
    %v305 = vsel %vm297, %v288, %v304
    %v306 = vsel %vm296, %v303, %v305
    %v307 = vsel %vm295, %v285, %v288
    %v308 = vsel %vm298, %v294, 1326507024
    %v309 = vsel %vm297, %v291, %v308
    %v310 = vsel %vm296, %v307, %v309
    %v311 = vshll.u32 %v271, 8
    %v312 = vmul.u32.u64.compose %v311, %v310
    %v313 = vextract.low.u32 %v312
    %v314 = vextract.high.u32 %v312
    %v315 = vmul.u32.u64.compose %v311, %v306
    %v316 = vextract.low.u32 %v315
    %v317 = vextract.high.u32 %v315
    %v318 = vmul.u32 %v311, %v302
    %v319 = vadd.s32 %v314, %v316
    %vm320 = vc.u32 %v314, %v316
    %v321 = vadd.s32 %v317, 1
    %v322 = vsel %vm320, %v321, %v317
    %v323 = vadd.s32 %v318, %v322
    %v324 = vadd.s32 %v323, 536870912
    %v325 = vshrl.u32 %v324, 30
    %v326 = vshll.u32 %v325, 30
    %v327 = vsub.s32 %v323, %v326
    %vm328 = vcmp.lt.s32.totalorder %v327, 0
    %v329 = vsub.s32 0, %v327
    %v330 = vsel %vm328, %v329, %v327
    %v331 = vclz %v330
    %v332 = vsub.s32 %v331, 2
    %vm333 = vcmp.gt.s32.totalorder 0, %v332
    %v334 = vsel %vm333, 0, %v332
    %v335 = vsub.s32 32, %v334
    %v336 = vshll.u32 %v327, %v334
    %v337 = vshrl.u32 %v319, %v335
    %v338 = vor.u32 %v336, %v337
    %v339 = vsub.s32 4294967266, %v334
    %v340 = vadd.s32 %v339, 127
    %v341 = vshll.u32 %v340, 23
    %v342 = vor.u32 4788187, %v341
    %v343 = vand.u32 2147483647, %v342
    %v345 = vcvt.s32.f32 %v338
    %v346 = vmul.f32 %v345, %v343
    %v347 = vxor.u32 %v346, 2147483648
    %v348 = vsel %vm265, %v347, %v346
    %v349 = vsub.s32 4, %v325
    %v350 = vsel %vm265, %v349, %v325
    %v351 = vsel %vm264, %v54, %v348
    %v352 = vsel %vm264, 0, %v350
    %v353 = vcosq.f32.pop %v351
    %v354 = vsinq.f32.pop %v351
    %vm355 = vweird.f32 %v54
    %v356 = vadd.s32 %v352, 3
    %v357 = vand.u32 %v356, 3
    %vm358 = vcmp.lt.s32.totalorder %v357, 2
    %vm359 = vcmp.eq.s32.totalorder %v357, 0
    %v360 = vxor.u32 %v354, 2147483648
    %v361 = vsel %vm359, %v353, %v360
    %vm362 = vcmp.eq.s32.totalorder %v357, 2
    %v363 = vxor.u32 %v353, 2147483648
    %v364 = vsel %vm362, %v363, %v354
    %v365 = vsel %vm358, %v361, %v364
    %v366 = vsel %vm355, nan, %v365
    %367 = vst [vmem:[#allocation2] sm:$0xff] %v158
    %368 = vst [vmem:[#allocation2 + $0x8] sm:$0xff] %v262
    %369 = vst [vmem:[#allocation2 + $0x10] sm:$0x3] %v366
    %v370 = vand.u32 2147483647, %v52
    %vm371 = vcmp.le.f32.partialorder %v370, 0.7853982
    %vm372 = vcmp.lt.s32.totalorder %v52, 0
    %v373 = vand.u32 %v52, 2139095040
    %v374 = vshrl.u32 %v373, 23
    %v375 = vsub.s32 %v374, 127
    %v376 = vand.u32 2147483647, %v52
    %v377 = vand.u32 %v376, 8388607
    %v378 = vor.u32 %v377, 8388608
    %v379 = vsub.s32 0, %v378
    %v380 = vadd.s32 %v375, 1
    %vm381 = vcmp.gt.s32.totalorder %v380, 0
    %v382 = vsel %vm381, %v380, 0
    %v383 = vshrl.u32 %v382, 5
    %v384 = vand.u32 %v382, 31
    %v385 = vsub.s32 32, %v384
    %v386 = vshrl.u32 683565275, %v385
    %v387 = vshll.u32 683565275, %v384
    %v388 = vshrl.u32 2475754826, %v385
    %v389 = vor.u32 %v387, %v388
    %v390 = vshll.u32 2475754826, %v384
    %v391 = vshrl.u32 2131351028, %v385
    %v392 = vor.u32 %v390, %v391
    %v393 = vshll.u32 2131351028, %v384
    %v394 = vshrl.u32 2102212464, %v385
    %v395 = vor.u32 %v393, %v394
    %v396 = vshll.u32 2102212464, %v384
    %v397 = vshrl.u32 920167782, %v385
    %v398 = vor.u32 %v396, %v397
    %v399 = vshll.u32 920167782, %v384
    %v400 = vshrl.u32 1326507024, %v385
    %v401 = vor.u32 %v399, %v400
    %vm402 = vcmp.lt.s32.totalorder %v383, 1
    %vm403 = vcmp.lt.s32.totalorder %v383, 2
    %vm404 = vcmp.lt.s32.totalorder %v383, 3
    %vm405 = vcmp.lt.s32.totalorder %v383, 4
    %v406 = vsel %vm402, %v386, %v389
    %v407 = vsel %vm405, %v395, 2102212464
    %v408 = vsel %vm404, %v392, %v407
    %v409 = vsel %vm403, %v406, %v408
    %v410 = vsel %vm402, %v389, %v392
    %v411 = vsel %vm405, %v398, 920167782
    %v412 = vsel %vm404, %v395, %v411
    %v413 = vsel %vm403, %v410, %v412
    %v414 = vsel %vm402, %v392, %v395
    %v415 = vsel %vm405, %v401, 1326507024
    %v416 = vsel %vm404, %v398, %v415
    %v417 = vsel %vm403, %v414, %v416
    %v418 = vshll.u32 %v378, 8
    %v419 = vmul.u32.u64.compose %v418, %v417
    %v420 = vextract.low.u32 %v419
    %v421 = vextract.high.u32 %v419
    %v422 = vmul.u32.u64.compose %v418, %v413
    %v423 = vextract.low.u32 %v422
    %v424 = vextract.high.u32 %v422
    %v425 = vmul.u32 %v418, %v409
    %v426 = vadd.s32 %v421, %v423
    %vm427 = vc.u32 %v421, %v423
    %v428 = vadd.s32 %v424, 1
    %v429 = vsel %vm427, %v428, %v424
    %v430 = vadd.s32 %v425, %v429
    %v431 = vadd.s32 %v430, 536870912
    %v432 = vshrl.u32 %v431, 30
    %v433 = vshll.u32 %v432, 30
    %v434 = vsub.s32 %v430, %v433
    %vm435 = vcmp.lt.s32.totalorder %v434, 0
    %v436 = vsub.s32 0, %v434
    %v437 = vsel %vm435, %v436, %v434
    %v438 = vclz %v437
    %v439 = vsub.s32 %v438, 2
    %vm440 = vcmp.gt.s32.totalorder 0, %v439
    %v441 = vsel %vm440, 0, %v439
    %v442 = vsub.s32 32, %v441
    %v443 = vshll.u32 %v434, %v441
    %v444 = vshrl.u32 %v426, %v442
    %v445 = vor.u32 %v443, %v444
    %v446 = vsub.s32 4294967266, %v441
    %v447 = vadd.s32 %v446, 127
    %v448 = vshll.u32 %v447, 23
    %v449 = vor.u32 4788187, %v448
    %v450 = vand.u32 2147483647, %v449
    %v452 = vcvt.s32.f32 %v445
    %v453 = vmul.f32 %v452, %v450
    %v454 = vxor.u32 %v453, 2147483648
    %v455 = vsel %vm372, %v454, %v453
    %v456 = vsub.s32 4, %v432
    %v457 = vsel %vm372, %v456, %v432
    %v458 = vsel %vm371, %v52, %v455
    %v459 = vsel %vm371, 0, %v457
    %v460 = vcosq.f32.pop %v458
    %v461 = vsinq.f32.pop %v458
    %vm462 = vweird.f32 %v52
    %v463 = vand.u32 %v459, 3
    %vm464 = vcmp.lt.s32.totalorder %v463, 2
    %vm465 = vcmp.eq.s32.totalorder %v463, 0
    %v466 = vxor.u32 %v461, 2147483648
    %v467 = vsel %vm465, %v460, %v466
    %vm468 = vcmp.eq.s32.totalorder %v463, 2
    %v469 = vxor.u32 %v460, 2147483648
    %v470 = vsel %vm468, %v469, %v461
    %v471 = vsel %vm464, %v467, %v470
    %v472 = vsel %vm462, nan, %v471
    %v473 = vand.u32 2147483647, %v53
    %vm474 = vcmp.le.f32.partialorder %v473, 0.7853982
    %vm475 = vcmp.lt.s32.totalorder %v53, 0
    %v476 = vand.u32 %v53, 2139095040
    %v477 = vshrl.u32 %v476, 23
    %v478 = vsub.s32 %v477, 127
    %v479 = vand.u32 2147483647, %v53
    %v480 = vand.u32 %v479, 8388607
    %v481 = vor.u32 %v480, 8388608
    %v482 = vsub.s32 0, %v481
    %v483 = vadd.s32 %v478, 1
    %vm484 = vcmp.gt.s32.totalorder %v483, 0
    %v485 = vsel %vm484, %v483, 0
    %v486 = vshrl.u32 %v485, 5
    %v487 = vand.u32 %v485, 31
    %v488 = vsub.s32 32, %v487
    %v489 = vshrl.u32 683565275, %v488
    %v490 = vshll.u32 683565275, %v487
    %v491 = vshrl.u32 2475754826, %v488
    %v492 = vor.u32 %v490, %v491
    %v493 = vshll.u32 2475754826, %v487
    %v494 = vshrl.u32 2131351028, %v488
    %v495 = vor.u32 %v493, %v494
    %v496 = vshll.u32 2131351028, %v487
    %v497 = vshrl.u32 2102212464, %v488
    %v498 = vor.u32 %v496, %v497
    %v499 = vshll.u32 2102212464, %v487
    %v500 = vshrl.u32 920167782, %v488
    %v501 = vor.u32 %v499, %v500
    %v502 = vshll.u32 920167782, %v487
    %v503 = vshrl.u32 1326507024, %v488
    %v504 = vor.u32 %v502, %v503
    %vm505 = vcmp.lt.s32.totalorder %v486, 1
    %vm506 = vcmp.lt.s32.totalorder %v486, 2
    %vm507 = vcmp.lt.s32.totalorder %v486, 3
    %vm508 = vcmp.lt.s32.totalorder %v486, 4
    %v509 = vsel %vm505, %v489, %v492
    %v510 = vsel %vm508, %v498, 2102212464
    %v511 = vsel %vm507, %v495, %v510
    %v512 = vsel %vm506, %v509, %v511
    %v513 = vsel %vm505, %v492, %v495
    %v514 = vsel %vm508, %v501, 920167782
    %v515 = vsel %vm507, %v498, %v514
    %v516 = vsel %vm506, %v513, %v515
    %v517 = vsel %vm505, %v495, %v498
    %v518 = vsel %vm508, %v504, 1326507024
    %v519 = vsel %vm507, %v501, %v518
    %v520 = vsel %vm506, %v517, %v519
    %v521 = vshll.u32 %v481, 8
    %v522 = vmul.u32.u64.compose %v521, %v520
    %v523 = vextract.low.u32 %v522
    %v524 = vextract.high.u32 %v522
    %v525 = vmul.u32.u64.compose %v521, %v516
    %v526 = vextract.low.u32 %v525
    %v527 = vextract.high.u32 %v525
    %v528 = vmul.u32 %v521, %v512
    %v529 = vadd.s32 %v524, %v526
    %vm530 = vc.u32 %v524, %v526
    %v531 = vadd.s32 %v527, 1
    %v532 = vsel %vm530, %v531, %v527
    %v533 = vadd.s32 %v528, %v532
    %v534 = vadd.s32 %v533, 536870912
    %v535 = vshrl.u32 %v534, 30
    %v536 = vshll.u32 %v535, 30
    %v537 = vsub.s32 %v533, %v536
    %vm538 = vcmp.lt.s32.totalorder %v537, 0
    %v539 = vsub.s32 0, %v537
    %v540 = vsel %vm538, %v539, %v537
    %v541 = vclz %v540
    %v542 = vsub.s32 %v541, 2
    %vm543 = vcmp.gt.s32.totalorder 0, %v542
    %v544 = vsel %vm543, 0, %v542
    %v545 = vsub.s32 32, %v544
    %v546 = vshll.u32 %v537, %v544
    %v547 = vshrl.u32 %v529, %v545
    %v548 = vor.u32 %v546, %v547
    %v549 = vsub.s32 4294967266, %v544
    %v550 = vadd.s32 %v549, 127
    %v551 = vshll.u32 %v550, 23
    %v552 = vor.u32 4788187, %v551
    %v553 = vand.u32 2147483647, %v552
    %v555 = vcvt.s32.f32 %v548
    %v556 = vmul.f32 %v555, %v553
    %v557 = vxor.u32 %v556, 2147483648
    %v558 = vsel %vm475, %v557, %v556
    %v559 = vsub.s32 4, %v535
    %v560 = vsel %vm475, %v559, %v535
    %v561 = vsel %vm474, %v53, %v558
    %v562 = vsel %vm474, 0, %v560
    %v563 = vcosq.f32.pop %v561
    %v564 = vsinq.f32.pop %v561
    %vm565 = vweird.f32 %v53
    %v566 = vand.u32 %v562, 3
    %vm567 = vcmp.lt.s32.totalorder %v566, 2
    %vm568 = vcmp.eq.s32.totalorder %v566, 0
    %v569 = vxor.u32 %v564, 2147483648
    %v570 = vsel %vm568, %v563, %v569
    %vm571 = vcmp.eq.s32.totalorder %v566, 2
    %v572 = vxor.u32 %v563, 2147483648
    %v573 = vsel %vm571, %v572, %v564
    %v574 = vsel %vm567, %v570, %v573
    %v575 = vsel %vm565, nan, %v574
    %v576 = vand.u32 2147483647, %v54
    %vm577 = vcmp.le.f32.partialorder %v576, 0.7853982
    %vm578 = vcmp.lt.s32.totalorder %v54, 0
    %v579 = vand.u32 %v54, 2139095040
    %v580 = vshrl.u32 %v579, 23
    %v581 = vsub.s32 %v580, 127
    %v582 = vand.u32 2147483647, %v54
    %v583 = vand.u32 %v582, 8388607
    %v584 = vor.u32 %v583, 8388608
    %v585 = vsub.s32 0, %v584
    %v586 = vadd.s32 %v581, 1
    %vm587 = vcmp.gt.s32.totalorder %v586, 0
    %v588 = vsel %vm587, %v586, 0
    %v589 = vshrl.u32 %v588, 5
    %v590 = vand.u32 %v588, 31
    %v591 = vsub.s32 32, %v590
    %v592 = vshrl.u32 683565275, %v591
    %v593 = vshll.u32 683565275, %v590
    %v594 = vshrl.u32 2475754826, %v591
    %v595 = vor.u32 %v593, %v594
    %v596 = vshll.u32 2475754826, %v590
    %v597 = vshrl.u32 2131351028, %v591
    %v598 = vor.u32 %v596, %v597
    %v599 = vshll.u32 2131351028, %v590
    %v600 = vshrl.u32 2102212464, %v591
    %v601 = vor.u32 %v599, %v600
    %v602 = vshll.u32 2102212464, %v590
    %v603 = vshrl.u32 920167782, %v591
    %v604 = vor.u32 %v602, %v603
    %v605 = vshll.u32 920167782, %v590
    %v606 = vshrl.u32 1326507024, %v591
    %v607 = vor.u32 %v605, %v606
    %vm608 = vcmp.lt.s32.totalorder %v589, 1
    %vm609 = vcmp.lt.s32.totalorder %v589, 2
    %vm610 = vcmp.lt.s32.totalorder %v589, 3
    %vm611 = vcmp.lt.s32.totalorder %v589, 4
    %v612 = vsel %vm608, %v592, %v595
    %v613 = vsel %vm611, %v601, 2102212464
    %v614 = vsel %vm610, %v598, %v613
    %v615 = vsel %vm609, %v612, %v614
    %v616 = vsel %vm608, %v595, %v598
    %v617 = vsel %vm611, %v604, 920167782
    %v618 = vsel %vm610, %v601, %v617
    %v619 = vsel %vm609, %v616, %v618
    %v620 = vsel %vm608, %v598, %v601
    %v621 = vsel %vm611, %v607, 1326507024
    %v622 = vsel %vm610, %v604, %v621
    %v623 = vsel %vm609, %v620, %v622
    %v624 = vshll.u32 %v584, 8
    %v625 = vmul.u32.u64.compose %v624, %v623
    %v626 = vextract.low.u32 %v625
    %v627 = vextract.high.u32 %v625
    %v628 = vmul.u32.u64.compose %v624, %v619
    %v629 = vextract.low.u32 %v628
    %v630 = vextract.high.u32 %v628
    %v631 = vmul.u32 %v624, %v615
    %v632 = vadd.s32 %v627, %v629
    %vm633 = vc.u32 %v627, %v629
    %v634 = vadd.s32 %v630, 1
    %v635 = vsel %vm633, %v634, %v630
    %v636 = vadd.s32 %v631, %v635
    %v637 = vadd.s32 %v636, 536870912
    %v638 = vshrl.u32 %v637, 30
    %v639 = vshll.u32 %v638, 30
    %v640 = vsub.s32 %v636, %v639
    %vm641 = vcmp.lt.s32.totalorder %v640, 0
    %v642 = vsub.s32 0, %v640
    %v643 = vsel %vm641, %v642, %v640
    %v644 = vclz %v643
    %v645 = vsub.s32 %v644, 2
    %vm646 = vcmp.gt.s32.totalorder 0, %v645
    %v647 = vsel %vm646, 0, %v645
    %v648 = vsub.s32 32, %v647
    %v649 = vshll.u32 %v640, %v647
    %v650 = vshrl.u32 %v632, %v648
    %v651 = vor.u32 %v649, %v650
    %v652 = vsub.s32 4294967266, %v647
    %v653 = vadd.s32 %v652, 127
    %v654 = vshll.u32 %v653, 23
    %v655 = vor.u32 4788187, %v654
    %v656 = vand.u32 2147483647, %v655
    %v658 = vcvt.s32.f32 %v651
    %v659 = vmul.f32 %v658, %v656
    %v660 = vxor.u32 %v659, 2147483648
    %v661 = vsel %vm578, %v660, %v659
    %v662 = vsub.s32 4, %v638
    %v663 = vsel %vm578, %v662, %v638
    %v664 = vsel %vm577, %v54, %v661
    %v665 = vsel %vm577, 0, %v663
    %v666 = vcosq.f32.pop %v664
    %v667 = vsinq.f32.pop %v664
    %vm668 = vweird.f32 %v54
    %v669 = vand.u32 %v665, 3
    %vm670 = vcmp.lt.s32.totalorder %v669, 2
    %vm671 = vcmp.eq.s32.totalorder %v669, 0
    %v672 = vxor.u32 %v667, 2147483648
    %v673 = vsel %vm671, %v666, %v672
    %vm674 = vcmp.eq.s32.totalorder %v669, 2
    %v675 = vxor.u32 %v666, 2147483648
    %v676 = vsel %vm674, %v675, %v667
    %v677 = vsel %vm670, %v673, %v676
    %v678 = vsel %vm668, nan, %v677
    %679 = vst [vmem:[#allocation2 + $0x12] sm:$0xff] %v472
    %680 = vst [vmem:[#allocation2 + $0x1a] sm:$0xff] %v575
    %681 = vst [vmem:[#allocation2 + $0x22] sm:$0x3] %v678
    %682 = vst [vmem:[#allocation2 + $0x24] sm:$0x7] %v33
    %683 = vst [vmem:[#allocation2 + $0x27] sm:$0x1] 0.0
    %v684 = vld [vmem:[#allocation2] sm:$0xff]
    %v685 = vld [vmem:[#allocation2 + $0x8] sm:$0xff]
    %v686 = vld [vmem:[#allocation2 + $0x10] sm:$0xff]
    %v687 = vld [vmem:[#allocation2 + $0x18] sm:$0xff]
    %v688 = vld [vmem:[#allocation2 + $0x20] sm:$0xff]
    %689 = vxpose.xlu0.b32.start [1/16] %v684, 128
    %690 = vxpose.xlu0.b32.cont [2/16] %v685, 128
    %691 = vxpose.xlu0.b32.cont [3/16] %v686, 128
    %692 = vxpose.xlu0.b32.cont [4/16] %v687, 128
    %693 = vxpose.xlu0.b32.cont [5/16] %v688, 128
    %694 = vxpose.xlu0.b32.cont [6/16] 0.0, 128
    %695 = vxpose.xlu0.b32.cont [7/16] 0.0, 128
    %696 = vxpose.xlu0.b32.cont [8/16] 0.0, 128
    %697 = vxpose.xlu0.b32.cont [9/16] 0.0, 128
    %698 = vxpose.xlu0.b32.cont [10/16] 0.0, 128
    %699 = vxpose.xlu0.b32.cont [11/16] 0.0, 128
    %700 = vxpose.xlu0.b32.cont [12/16] 0.0, 128
    %701 = vxpose.xlu0.b32.cont [13/16] 0.0, 128
    %702 = vxpose.xlu0.b32.cont [14/16] 0.0, 128
    %703 = vxpose.xlu0.b32.cont [15/16] 0.0, 128
    %704 = vxpose.xlu0.b32.end [16/16] 0.0, 128
    %v705 = vpop.trf.xlu0
    %v706 = vpop.trf.xlu0
    %v707 = vpop.trf.xlu0
    %v708 = vpop.trf.xlu0
    %v709 = vpop.trf.xlu0
    %v710 = vpop.trf.xlu0
    %v711 = vpop.trf.xlu0
    %v712 = vpop.trf.xlu0
    %v713 = vpop.trf.xlu0
    %v714 = vpop.trf.xlu0
    %v715 = vpop.trf.xlu0
    %v716 = vpop.trf.xlu0
    %v717 = vpop.trf.xlu0
    %v718 = vpop.trf.xlu0
    %v719 = vpop.trf.xlu0
    %v720 = vpop.trf.xlu0
    %vm721 = vcmask 318464
    %722 = vst.msk [vmem:[#allocation6] sm:$0xff] %vm721, %v705
    %723 = vst.msk [vmem:[#allocation6 + $0x8] sm:$0xff] %vm721, %v706
    %724 = vst.msk [vmem:[#allocation6 + $0x10] sm:$0xff] %vm721, %v707
    %725 = vst.msk [vmem:[#allocation6 + $0x18] sm:$0xff] %vm721, %v708
    %726 = vst.msk [vmem:[#allocation6 + $0x20] sm:$0xff] %vm721, %v709
    %727 = vst.msk [vmem:[#allocation6 + $0x28] sm:$0xff] %vm721, %v710
    %728 = vst.msk [vmem:[#allocation6 + $0x30] sm:$0xff] %vm721, %v711
    %729 = vst.msk [vmem:[#allocation6 + $0x38] sm:$0xff] %vm721, %v712
    %730 = vst.msk [vmem:[#allocation6 + $0x40] sm:$0xff] %vm721, %v713
    %731 = vst.msk [vmem:[#allocation6 + $0x48] sm:$0xff] %vm721, %v714
    %732 = vst.msk [vmem:[#allocation6 + $0x50] sm:$0xff] %vm721, %v715
    %733 = vst.msk [vmem:[#allocation6 + $0x58] sm:$0xff] %vm721, %v716
    %734 = vst.msk [vmem:[#allocation6 + $0x60] sm:$0xff] %vm721, %v717
    %735 = vst.msk [vmem:[#allocation6 + $0x68] sm:$0xff] %vm721, %v718
    %736 = vst.msk [vmem:[#allocation6 + $0x70] sm:$0xff] %vm721, %v719
    %737 = vst.msk [vmem:[#allocation6 + $0x78] sm:$0xff] %vm721, %v720
    // Predicated region
    $region10: #{tpu_custom_call.1} parent=1 // pred_check
      _
    $region11: #{tpu_custom_call.1} parent=1 // pred_check_branch
      %739 = sbr.rel (0) target = $region13
    $region12: #{tpu_custom_call.1} parent=1 // pred_region
      %s741 = ssub.s32 2048, 512
      %742 = vsyncadd [#allocation5], %s741
      %s743 = sshll.u32 [#allocation6], 4
      %s744 = int_to_ptr.vmem [resolvable:$true] %s743
      %749 = dma.vmem_to_hbm [thread:$0]  %s744, 512, %s1, [#allocation5], 128, 128, 8
    $region13: #{tpu_custom_call.1} parent=1 // pred_fallthru
      _
    // Predicated region
    $region14: #{tpu_custom_call.1} parent=1 // pred_check
      _
    $region15: #{tpu_custom_call.1} parent=1 // pred_check_branch
      %751 = sbr.rel (0) target = $region17
    $region16: #{tpu_custom_call.1} parent=1 // pred_region
      %752 = dma.done [#allocation5], 2048
    $region17: #{tpu_custom_call.1} parent=1 // pred_fallthru
      _
    %753 = vsyncpa [#allocation4], 1
    %754 = vsyncpa [#allocation5], 1

</llo_original>
